<compile_context>
chip_gen: v7x
topology: tpu7x:2x2x1
jax: 0.10.0
libtpu: 0.0.40
codegen_flags: <defaults>
</compile_context>

<pallas_src>
import functools

import jax
import jax.numpy as jnp
import numpy as np
from jax.experimental import pallas as pl
from jax.experimental.pallas import tpu as pltpu


def pool_fc_kernel(x_ref, w1_ref, w2_ref, scale_ref, acc_ref, *, inv_s):
    """Accumulate per-(N, C) spatial sums across grid steps; on the last step
    run the squeeze-excite MLP (Linear -> ReLU -> Linear -> Sigmoid)."""
    step = pl.program_id(0)

    @pl.when(step == 0)
    def _init():
        acc_ref[...] = jnp.zeros_like(acc_ref)

    # Partial sum over this lane-dense spatial tile: (N, C, ts) -> (N, C).
    acc_ref[...] += jnp.sum(x_ref[...], axis=-1)

    @pl.when(step == pl.num_programs(0) - 1)
    def _finalize():
        pooled = acc_ref[...] * inv_s                            # (N, C) mean
        h = jnp.dot(pooled, w1_ref[...],
                    preferred_element_type=jnp.float32)          # (N, Ch)
        h = jnp.maximum(h, 0.0)
        logits = jnp.dot(h, w2_ref[...],
                         preferred_element_type=jnp.float32)     # (N, C)
        scale_ref[...] = 1.0 / (1.0 + jnp.exp(-logits))          # sigmoid


def scale_kernel(x_ref, scale_ref, o_ref):
    """z = x * scale, broadcast per-(N, C) scale along the spatial lane axis."""
    o_ref[...] = x_ref[...] * scale_ref[...][:, :, None]


def se_block(x, w1_t, w2_t, *, spatial_tile=2048):
    """SE_Block forward.

    x    : (N, C, D, H, W) float32
    w1_t : (C, C//r)   == nn.Linear(C, C//r, bias=False).weight.T
    w2_t : (C//r, C)   == nn.Linear(C//r, C, bias=False).weight.T
    returns (N, C, D, H, W) float32
    """
    N, C, D, H, W = x.shape
    S = D * H * W
    x3 = x.reshape(N, C, S).astype(jnp.float32)      # NCDHW -> (N, C, S), free reshape

    # Lane-dense spatial tile: multiple of 128, bounded so VMEM stays small.
    ts = max(128, min(int(spatial_tile), S))
    ts = (ts // 128) * 128
    s_pad = ((S + ts - 1) // ts) * ts
    if s_pad != S:
        # Zero padding: does not perturb the sum (mean divides by true S);
        # padded columns of the output are sliced off below.
        x3 = jnp.pad(x3, ((0, 0), (0, 0), (0, s_pad - S)))
    n_tiles = s_pad // ts

    # ---- pass 1: global average pool + fused SE MLP -> per-(N, C) scale ------
    scale = pl.pallas_call(
        functools.partial(pool_fc_kernel, inv_s=1.0 / float(S)),
        out_shape=jax.ShapeDtypeStruct((N, C), jnp.float32),
        grid=(n_tiles,),
        in_specs=[
            pl.BlockSpec((N, C, ts), lambda s: (0, 0, s)),
            pl.BlockSpec(w1_t.shape, lambda s: (0, 0)),   # resident, tiny
            pl.BlockSpec(w2_t.shape, lambda s: (0, 0)),   # resident, tiny
        ],
        out_specs=pl.BlockSpec((N, C), lambda s: (0, 0)),  # resident accumulator output
        scratch_shapes=[pltpu.VMEM((N, C), jnp.float32)],
        compiler_params=pltpu.CompilerParams(
            dimension_semantics=("arbitrary",)),
    )(x3, w1_t, w2_t)

    # ---- pass 2: channel-wise rescale, lane-dense tiles, parallel grid -------
    z3 = pl.pallas_call(
        scale_kernel,
        out_shape=jax.ShapeDtypeStruct((N, C, s_pad), jnp.float32),
        grid=(n_tiles,),
        in_specs=[
            pl.BlockSpec((N, C, ts), lambda s: (0, 0, s)),
            pl.BlockSpec((N, C), lambda s: (0, 0)),
        ],
        out_specs=pl.BlockSpec((N, C, ts), lambda s: (0, 0, s)),
        compiler_params=pltpu.CompilerParams(
            dimension_semantics=("parallel",)),
    )(x3, scale)

    if s_pad != S:
        z3 = z3[:, :, :S]
    return z3.reshape(N, C, D, H, W)


def reference(x, w1_t, w2_t):
    """Pure-JAX reference of the SE_Block forward."""
    y = jnp.mean(x, axis=(2, 3, 4))                     # (N, C)
    h = jnp.maximum(y @ w1_t, 0.0)                      # (N, Ch)
    s = jax.nn.sigmoid(h @ w2_t)                        # (N, C)
    return x * s[:, :, None, None, None]


if __name__ == "__main__":
    # Small shapes consistent with SE_Block(in_channel=32, reduction=16):
    # N=2, C=32, D=H=W=16  -> S=4096 spatial elements, hidden dim C//16 = 2.
    N, C, D, H, W = 2, 32, 16, 16, 16
    reduction = 16
    Ch = C // reduction

    key = jax.random.PRNGKey(0)
    kx, k1, k2 = jax.random.split(key, 3)

    x = jax.random.normal(kx, (N, C, D, H, W), jnp.float32)

    # PyTorch nn.Linear(bias=False) weights: fc1.weight (Ch, C), fc2.weight (C, Ch).
    fc1_w = jax.random.normal(k1, (Ch, C), jnp.float32) * (1.0 / np.sqrt(C))
    fc2_w = jax.random.normal(k2, (C, Ch), jnp.float32) * (1.0 / np.sqrt(Ch))
    w1_t = fc1_w.T   # (C, Ch)
    w2_t = fc2_w.T   # (Ch, C)

    out = jax.block_until_ready(se_block(x, w1_t, w2_t))
    ref = jax.block_until_ready(reference(x, w1_t, w2_t))

    np.testing.assert_allclose(np.asarray(out), np.asarray(ref),
                               rtol=1e-4, atol=1e-5)
    print("KERNEL_OK")
</pallas_src>

<mosaic_0001>
module attributes {stable_mosaic.version = 11 : i64} {
  func.func @pool_fc_kernel(%arg0: i32, %arg1: memref<2x32x2048xf32, #tpu.memory_space<vmem>>, %arg2: memref<32x2xf32, #tpu.memory_space<vmem>>, %arg3: memref<2x32xf32, #tpu.memory_space<vmem>>, %arg4: memref<2x32xf32, #tpu.memory_space<vmem>>, %arg5: memref<2x32xf32, #tpu.memory_space<vmem>>) attributes {dimension_semantics = [#tpu.dimension_semantics<arbitrary>], iteration_bounds = array<i64: 2>, scalar_prefetch = 0 : i64, scratch_operands = 1 : i64, tpu.core_type = #tpu.core_type<tc>, window_params = [{transform_indices = @transform_0, window_bounds = array<i64: 2, 32, 2048>}, {pipeline_mode = #tpu.pipeline_mode<synchronous>, transform_indices = @transform_1, window_bounds = array<i64: 32, 2>}, {pipeline_mode = #tpu.pipeline_mode<synchronous>, transform_indices = @transform_2, window_bounds = array<i64: 2, 32>}, {pipeline_mode = #tpu.pipeline_mode<synchronous>, transform_indices = @transform_3, window_bounds = array<i64: 2, 32>}]} {
    %c0_i32 = arith.constant 0 : i32
    %0 = arith.cmpi eq, %arg0, %c0_i32 : i32
    %1 = arith.extui %0 : i1 to i32
    %c0_i32_0 = arith.constant 0 : i32
    %2 = arith.cmpi ne, %1, %c0_i32_0 : i32
    scf.if %2 {
      %cst_8 = arith.constant 0.000000e+00 : f32
      %11 = vector.broadcast %cst_8 : f32 to vector<2x32xf32>
      %c0_9 = arith.constant 0 : index
      %c0_10 = arith.constant 0 : index
      %12 = vector.load %arg5[%c0_9, %c0_10] : memref<2x32xf32, #tpu.memory_space<vmem>>, vector<2x32xf32>
      tpu.vector_store %arg5[%c0_9, %c0_10], %11 {strides = array<i32>} : memref<2x32xf32, #tpu.memory_space<vmem>>, vector<2x32xf32>,
    } else {
    }
    %c0 = arith.constant 0 : index
    %c0_1 = arith.constant 0 : index
    %3 = vector.load %arg5[%c0, %c0_1] : memref<2x32xf32, #tpu.memory_space<vmem>>, vector<2x32xf32>
    %c0_2 = arith.constant 0 : index
    %c0_3 = arith.constant 0 : index
    %c0_4 = arith.constant 0 : index
    %4 = vector.load %arg1[%c0_2, %c0_3, %c0_4] : memref<2x32x2048xf32, #tpu.memory_space<vmem>>, vector<2x32x2048xf32>
    %cst = arith.constant dense<0.000000e+00> : vector<2x32xf32>
    %5 = vector.multi_reduction <add>, %4, %cst [2] : vector<2x32x2048xf32> to vector<2x32xf32>
    %6 = arith.addf %3, %5 : vector<2x32xf32>
    %c0_5 = arith.constant 0 : index
    %c0_6 = arith.constant 0 : index
    %7 = vector.load %arg5[%c0_5, %c0_6] : memref<2x32xf32, #tpu.memory_space<vmem>>, vector<2x32xf32>
    tpu.vector_store %arg5[%c0_5, %c0_6], %6 {strides = array<i32>} : memref<2x32xf32, #tpu.memory_space<vmem>>, vector<2x32xf32>,
    %c1_i32 = arith.constant 1 : i32
    %8 = arith.cmpi eq, %arg0, %c1_i32 : i32
    %9 = arith.extui %8 : i1 to i32
    %c0_i32_7 = arith.constant 0 : i32
    %10 = arith.cmpi ne, %9, %c0_i32_7 : i32
    scf.if %10 {
      %c0_8 = arith.constant 0 : index
      %c0_9 = arith.constant 0 : index
      %11 = vector.load %arg5[%c0_8, %c0_9] : memref<2x32xf32, #tpu.memory_space<vmem>>, vector<2x32xf32>
      %cst_10 = arith.constant 2.44140625E-4 : f32
      %12 = vector.broadcast %cst_10 : f32 to vector<2x32xf32>
      %13 = arith.mulf %11, %12 : vector<2x32xf32>
      %c0_11 = arith.constant 0 : index
      %c0_12 = arith.constant 0 : index
      %14 = vector.load %arg2[%c0_11, %c0_12] : memref<32x2xf32, #tpu.memory_space<vmem>>, vector<32x2xf32>
      %cst_13 = arith.constant dense<0.000000e+00> : vector<2x2xf32>
      %15 = tpu.matmul %13, %14, %cst_13 {dimension_numbers = #tpu.dot_dimension_numbers<[1], [0], [0], [1], [0, 0, 1, 1], [], []>} : vector<2x32xf32>, vector<32x2xf32>, vector<2x2xf32> -> vector<2x2xf32>
      %cst_14 = arith.constant 0.000000e+00 : f32
      %16 = vector.broadcast %cst_14 : f32 to vector<2x2xf32>
      %17 = arith.maximumf %15, %16 : vector<2x2xf32>
      %c0_15 = arith.constant 0 : index
      %c0_16 = arith.constant 0 : index
      %18 = vector.load %arg3[%c0_15, %c0_16] : memref<2x32xf32, #tpu.memory_space<vmem>>, vector<2x32xf32>
      %cst_17 = arith.constant dense<0.000000e+00> : vector<2x32xf32>
      %19 = tpu.matmul %17, %18, %cst_17 {dimension_numbers = #tpu.dot_dimension_numbers<[1], [0], [0], [1], [0, 0, 1, 1], [], []>} : vector<2x2xf32>, vector<2x32xf32>, vector<2x32xf32> -> vector<2x32xf32>
      %cst_18 = arith.constant 0.000000e+00 : f32
      %20 = vector.broadcast %cst_18 : f32 to vector<2x32xf32>
      %21 = arith.subf %20, %19 : vector<2x32xf32>
      %22 = math.exp %21 : vector<2x32xf32>
      %cst_19 = arith.constant 1.000000e+00 : f32
      %23 = vector.broadcast %cst_19 : f32 to vector<2x32xf32>
      %24 = arith.addf %23, %22 : vector<2x32xf32>
      %cst_20 = arith.constant 1.000000e+00 : f32
      %25 = vector.broadcast %cst_20 : f32 to vector<2x32xf32>
      %26 = arith.divf %25, %24 : vector<2x32xf32>
      %c0_21 = arith.constant 0 : index
      %c0_22 = arith.constant 0 : index
      %27 = vector.load %arg4[%c0_21, %c0_22] : memref<2x32xf32, #tpu.memory_space<vmem>>, vector<2x32xf32>
      tpu.vector_store %arg4[%c0_21, %c0_22], %26 {strides = array<i32>} : memref<2x32xf32, #tpu.memory_space<vmem>>, vector<2x32xf32>,
    } else {
    }
    return
  }
  func.func @transform_0(%arg0: i32) -> (i32, i32, i32) {
    %c0_i32 = arith.constant 0 : i32
    %c0_i32_0 = arith.constant 0 : i32
    %c0_i32_1 = arith.constant 0 : i32
    return %c0_i32, %c0_i32_0, %arg0 : i32, i32, i32
  }
  func.func @transform_1(%arg0: i32) -> (i32, i32) {
    %c0_i32 = arith.constant 0 : i32
    %c0_i32_0 = arith.constant 0 : i32
    %c0_i32_1 = arith.constant 0 : i32
    return %c0_i32, %c0_i32_0 : i32, i32
  }
  func.func @transform_2(%arg0: i32) -> (i32, i32) {
    %c0_i32 = arith.constant 0 : i32
    %c0_i32_0 = arith.constant 0 : i32
    %c0_i32_1 = arith.constant 0 : i32
    return %c0_i32, %c0_i32_0 : i32, i32
  }
  func.func @transform_3(%arg0: i32) -> (i32, i32) {
    %c0_i32 = arith.constant 0 : i32
    %c0_i32_0 = arith.constant 0 : i32
    %c0_i32_1 = arith.constant 0 : i32
    return %c0_i32, %c0_i32_0 : i32, i32
  }
}

</mosaic_0001>

<llo_original>
// kernel: tpu_custom_call.1
$region0: #{tpu_custom_call.1}
  #allocation0 [shape = 'u32[]', space=smem, size = 0x4, offset = 0x4, fixed_abs, tag = 'smem constant byte address 0x4 - core index']
  #allocation1 [shape = 'u32[144,128]{1,0:T(1,128)}', space=vmem, size = 0x12000, scoped, tag = 'internal scratch']
  #allocation2 [shape = 'f32[2,32]{1,0:T(2,128)}', space=vmem, size = 0x400, scoped, tag = 'scratch operand']
  %s0 = inlined_call_operand.hbm [shape: f32[2,32,4096], index: 0, kind: input, shape index: {}]
  %s1 = inlined_call_operand.vmem [shape: f32[32,2], index: 1, kind: input, shape index: {}]
  %s2 = inlined_call_operand.vmem [shape: f32[2,32], index: 2, kind: input, shape index: {}]
  %s3 = inlined_call_operand.hbm [shape: f32[2,32], index: 3, kind: output, shape index: {}]
  %s4 = sld [smem:[#allocation0]]
  $region57: #{tpu_custom_call.1} parent=0
    _
  %s6 = ssub.s32 1, %s4
  %s7 = scalar_select 0, %s6, %s4
  $region1: #{tpu_custom_call.1} parent=0
    #allocation3 [shape = 'u8[1048576]{0}', space=vmem, size = 0x100000, scoped, tag = 'input window, operand 0']
    #allocation4 [shape = 's32[2]{0}', space=sflag, size = 0x8, scoped, tag = 'scoped memory for tpu_custom_call.1']
    #allocation5 [shape = 's32[2]{0}', space=sflag, size = 0x8, scoped, tag = 'scoped memory for tpu_custom_call.1']
    #allocation6 [shape = 'u8[1024]{0}', space=vmem, size = 0x400, scoped, tag = 'output window, operand 0, single buffered']
    %8 = vsyncpa [#allocation4], 0
    %s9 = scalar_lea.sflag [#allocation4], 1
    %10 = vsyncpa %s9, 0
    %11 = vsyncpa [#allocation5], 0
    loop: start=0, step=1, limit=4
    $region2: #{tpu_custom_call.1} parent=1 // loop_pre_header
      _
    $region3: #{tpu_custom_call.1} parent=1 // loop_header
      %s13 = sphi 0, %s17
      %p14 = scmp.ge.s32.totalorder %s13, 4
      %s23 = sphi 0, %s25
      %s26 = sphi 0, %s23
      %s27 = sphi 0, %s26
      %s43 = sphi 0, %s27
      %s47 = sphi 0, %s47
      %s49 = sphi 0, %s47
      %s50 = sphi 0, %s49
      %s64 = sphi 0, %s50
      %s68 = sphi 0, %s68
      %s70 = sphi 0, %s68
      %s71 = sphi 0, %s70
      %s85 = sphi 0, %s71
      %s89 = sphi 0, %s89
      %s91 = sphi 0, %s89
      %s92 = sphi 0, %s91
      %s106 = sphi 0, %s92
    $region4: #{tpu_custom_call.1} parent=1 // loop_header_branch
      %16 = sbr.rel (%p14) target = $region8
    $region5: #{tpu_custom_call.1} parent=1 // loop_body
      %s18 = ssub.s32 %s13, 1
      %s19 = ssub.s32 %s13, 2
      %s20 = sadd.s32 %s13, 1
      %s21 = ssub.s32 %s13, %s20
      %p22 = scmp.eq.s32.totalorder %s21, 0
      %s24 = sadd.s32 %s23, 1
      %s25 = scalar_select %p22, %s23, %s24
      %p28 = pneg %p22
      %p29 = scmp.eq.s32.totalorder %s13, 1
      %p30 = por %p28, %p29
      %p31 = scmp.ne.s32.totalorder %s23, %s26
      %p32 = scmp.eq.s32.totalorder %s13, 0
      %p33 = por %p31, %p32
      %p34 = scmp.ne.s32.totalorder %s23, %s26
      %p35 = scmp.eq.s32.totalorder %s18, 1
      %p36 = por %p34, %p35
      %p37 = scmp.ne.s32.totalorder %s26, %s27
      %p38 = scmp.eq.s32.totalorder %s18, 0
      %p39 = por %p37, %p38
      %p40 = scmp.ne.s32.totalorder %s26, %s27
      %p41 = scmp.eq.s32.totalorder %s19, 1
      %p42 = por %p40, %p41
      %p44 = scmp.ne.s32.totalorder %s27, %s43
      %p45 = scmp.eq.s32.totalorder %s19, 0
      %p46 = por %p44, %p45
      %s48 = sadd.s32 %s47, 1
      %p51 = scmp.eq.s32.totalorder %s13, 1
      %p52 = scmp.ne.s32.totalorder %s47, %s49
      %p53 = scmp.eq.s32.totalorder %s13, 0
      %p54 = por %p52, %p53
      %p55 = scmp.ne.s32.totalorder %s47, %s49
      %p56 = scmp.eq.s32.totalorder %s18, 1
      %p57 = por %p55, %p56
      %p58 = scmp.ne.s32.totalorder %s49, %s50
      %p59 = scmp.eq.s32.totalorder %s18, 0
      %p60 = por %p58, %p59
      %p61 = scmp.ne.s32.totalorder %s49, %s50
      %p62 = scmp.eq.s32.totalorder %s19, 1
      %p63 = por %p61, %p62
      %p65 = scmp.ne.s32.totalorder %s50, %s64
      %p66 = scmp.eq.s32.totalorder %s19, 0
      %p67 = por %p65, %p66
      %s69 = sadd.s32 %s68, 1
      %p72 = scmp.eq.s32.totalorder %s13, 1
      %p73 = scmp.ne.s32.totalorder %s68, %s70
      %p74 = scmp.eq.s32.totalorder %s13, 0
      %p75 = por %p73, %p74
      %p76 = scmp.ne.s32.totalorder %s68, %s70
      %p77 = scmp.eq.s32.totalorder %s18, 1
      %p78 = por %p76, %p77
      %p79 = scmp.ne.s32.totalorder %s70, %s71
      %p80 = scmp.eq.s32.totalorder %s18, 0
      %p81 = por %p79, %p80
      %p82 = scmp.ne.s32.totalorder %s70, %s71
      %p83 = scmp.eq.s32.totalorder %s19, 1
      %p84 = por %p82, %p83
      %p86 = scmp.ne.s32.totalorder %s71, %s85
      %p87 = scmp.eq.s32.totalorder %s19, 0
      %p88 = por %p86, %p87
      %s90 = sadd.s32 %s89, 1
      %p93 = scmp.eq.s32.totalorder %s13, 1
      %p94 = scmp.ne.s32.totalorder %s89, %s91
      %p95 = scmp.eq.s32.totalorder %s13, 0
      %p96 = por %p94, %p95
      %p97 = scmp.ne.s32.totalorder %s89, %s91
      %p98 = scmp.eq.s32.totalorder %s18, 1
      %p99 = por %p97, %p98
      %p100 = scmp.ne.s32.totalorder %s91, %s92
      %p101 = scmp.eq.s32.totalorder %s18, 0
      %p102 = por %p100, %p101
      %p103 = scmp.ne.s32.totalorder %s91, %s92
      %p104 = scmp.eq.s32.totalorder %s19, 1
      %p105 = por %p103, %p104
      %p107 = scmp.ne.s32.totalorder %s92, %s106
      %p108 = scmp.eq.s32.totalorder %s19, 0
      %p109 = por %p107, %p108
      %p110 = scmp.le.s32.totalorder 1, %s13
      %p111 = scmp.lt.s32.totalorder %s13, 3
      %p112 = pnand %p110, %p111
      %p113 = pneg %p112
      // Predicated region
      $region9: #{tpu_custom_call.1} parent=5 // pred_check
        _
      $region10: #{tpu_custom_call.1} parent=5 // pred_check_branch
        %115 = sbr.rel (%p112) target = $region12
      $region11: #{tpu_custom_call.1} parent=5 // pred_region
        %s116 = ssub.s32 %s13, 1
        // Predicated region
        $region13: #{tpu_custom_call.1} parent=11 // pred_check
          %p117 = pneg %p60
        $region14: #{tpu_custom_call.1} parent=11 // pred_check_branch
          %119 = sbr.rel (%p117) target = $region16
        $region15: #{tpu_custom_call.1} parent=11 // pred_region
          _
        $region16: #{tpu_custom_call.1} parent=11 // pred_fallthru
          _
        // Predicated region
        $region17: #{tpu_custom_call.1} parent=11 // pred_check
          %p120 = pneg %p81
        $region18: #{tpu_custom_call.1} parent=11 // pred_check_branch
          %122 = sbr.rel (%p120) target = $region20
        $region19: #{tpu_custom_call.1} parent=11 // pred_region
          _
        $region20: #{tpu_custom_call.1} parent=11 // pred_fallthru
          _
      $region12: #{tpu_custom_call.1} parent=5 // pred_fallthru
        _
      %p123 = scmp.lt.s32.totalorder %s13, 2
      // Predicated region
      $region21: #{tpu_custom_call.1} parent=5 // pred_check
        %p124 = pneg %p123
      $region22: #{tpu_custom_call.1} parent=5 // pred_check_branch
        %126 = sbr.rel (%p124) target = $region24
      $region23: #{tpu_custom_call.1} parent=5 // pred_region
        // Predicated region
        $region25: #{tpu_custom_call.1} parent=23 // pred_check
          %p127 = pneg %p33
        $region26: #{tpu_custom_call.1} parent=23 // pred_check_branch
          %129 = sbr.rel (%p127) target = $region28
        $region27: #{tpu_custom_call.1} parent=23 // pred_region
          %s130 = sand.u32 %s23, 1
          %s131 = scalar_lea.sflag [#allocation4], %s130
          %s132 = sand.u32 %s23, 1
          %s133 = smul.addr %s132, 1024
          %s134 = scalar_lea.vmem [#allocation3], %s133
          %s135 = smul.u32 16, %s13
          %s137 = ssub.s32 16384, 16384
          %138 = vsyncadd %s131, %s137
          %s139 = smul.addr %s135, 128
          %s140 = scalar_lea.hbm %s0, %s139
          %s141 = sshll.u32 %s134, 4
          %s142 = int_to_ptr.vmem [resolvable:$true] %s141
          %147 = dma.hbm_to_vmem [thread:$0]  %s140, 16384, %s142, %s131, 4096, 2048, 128
        $region28: #{tpu_custom_call.1} parent=23 // pred_fallthru
          _
      $region24: #{tpu_custom_call.1} parent=5 // pred_fallthru
        _
      %p148 = scmp.le.s32.totalorder 1, %s13
      %p149 = scmp.lt.s32.totalorder %s13, 3
      %p150 = pnand %p148, %p149
      %p151 = pneg %p150
      // Predicated region
      $region29: #{tpu_custom_call.1} parent=5 // pred_check
        _
      $region30: #{tpu_custom_call.1} parent=5 // pred_check_branch
        %153 = sbr.rel (%p150) target = $region32
      $region31: #{tpu_custom_call.1} parent=5 // pred_region
        %s154 = ssub.s32 %s13, 1
        %s155 = sand.u32 %s26, 1
        %s156 = scalar_lea.sflag [#allocation4], %s155
        %s157 = sand.u32 %s26, 1
        %s158 = smul.addr %s157, 1024
        %s159 = scalar_lea.vmem [#allocation3], %s158
        // Predicated region
        $region33: #{tpu_custom_call.1} parent=31 // pred_check
          %p160 = pneg %p39
        $region34: #{tpu_custom_call.1} parent=31 // pred_check_branch
          %162 = sbr.rel (%p160) target = $region36
        $region35: #{tpu_custom_call.1} parent=31 // pred_region
          %163 = dma.done %s156, 16384
        $region36: #{tpu_custom_call.1} parent=31 // pred_fallthru
          _
        %s164 = sand.u32 %s26, 1
        %s165 = scalar_lea.sflag [#allocation4], %s164
        %s166 = sand.u32 %s26, 1
        %s167 = smul.addr %s166, 1024
        %s168 = scalar_lea.vmem [#allocation3], %s167
        %p169 = pneg %p39
        %p170 = pneg %p36
        %p171 = pneg %p60
        %p172 = pneg %p57
        %p173 = pneg %p81
        %p174 = pneg %p78
        %p175 = pneg %p102
        %p176 = pneg %p99
        %s177 = smul.u32 16, %s18
        %p178 = scmp.eq.s32.totalorder %s18, 0
        // Predicated region
        $region37: #{tpu_custom_call.1} parent=31 // pred_check
          %p179 = pneg %p178
        $region38: #{tpu_custom_call.1} parent=31 // pred_check_branch
          %181 = sbr.rel (%p179) target = $region40
        $region39: #{tpu_custom_call.1} parent=31 // pred_region
          %vm182 = vcmask 254976
          %183 = vst.msk [vmem:[#allocation2] sm:$0x3] %vm182, 0.0
        $region40: #{tpu_custom_call.1} parent=31 // pred_fallthru
          _
        %v184 = vld [vmem:[#allocation2] sm:$0x3]
        %v185 = vld [vmem:[%s159] sm:$0xff]
        %v186 = vld [vmem:[%s159 + $0x8] sm:$0xff]
        %v187 = vld [vmem:[%s159 + $0x10] sm:$0xff]
        %v188 = vld [vmem:[%s159 + $0x18] sm:$0xff]
        %v189 = vld [vmem:[%s159 + $0x20] sm:$0xff]
        %v190 = vld [vmem:[%s159 + $0x28] sm:$0xff]
        %v191 = vld [vmem:[%s159 + $0x30] sm:$0xff]
        %v192 = vld [vmem:[%s159 + $0x38] sm:$0xff]
        %v193 = vld [vmem:[%s159 + $0x40] sm:$0xff]
        %v194 = vld [vmem:[%s159 + $0x48] sm:$0xff]
        %v195 = vld [vmem:[%s159 + $0x50] sm:$0xff]
        %v196 = vld [vmem:[%s159 + $0x58] sm:$0xff]
        %v197 = vld [vmem:[%s159 + $0x60] sm:$0xff]
        %v198 = vld [vmem:[%s159 + $0x68] sm:$0xff]
        %v199 = vld [vmem:[%s159 + $0x70] sm:$0xff]
        %v200 = vld [vmem:[%s159 + $0x78] sm:$0xff]
        %v201 = vld [vmem:[%s159 + $0x80] sm:$0xff]
        %v202 = vld [vmem:[%s159 + $0x88] sm:$0xff]
        %v203 = vld [vmem:[%s159 + $0x90] sm:$0xff]
        %v204 = vld [vmem:[%s159 + $0x98] sm:$0xff]
        %v205 = vld [vmem:[%s159 + $0xa0] sm:$0xff]
        %v206 = vld [vmem:[%s159 + $0xa8] sm:$0xff]
        %v207 = vld [vmem:[%s159 + $0xb0] sm:$0xff]
        %v208 = vld [vmem:[%s159 + $0xb8] sm:$0xff]
        %v209 = vld [vmem:[%s159 + $0xc0] sm:$0xff]
        %v210 = vld [vmem:[%s159 + $0xc8] sm:$0xff]
        %v211 = vld [vmem:[%s159 + $0xd0] sm:$0xff]
        %v212 = vld [vmem:[%s159 + $0xd8] sm:$0xff]
        %v213 = vld [vmem:[%s159 + $0xe0] sm:$0xff]
        %v214 = vld [vmem:[%s159 + $0xe8] sm:$0xff]
        %v215 = vld [vmem:[%s159 + $0xf0] sm:$0xff]
        %v216 = vld [vmem:[%s159 + $0xf8] sm:$0xff]
        %v217 = vld [vmem:[%s159 + $0x100] sm:$0xff]
        %v218 = vld [vmem:[%s159 + $0x108] sm:$0xff]
        %v219 = vld [vmem:[%s159 + $0x110] sm:$0xff]
        %v220 = vld [vmem:[%s159 + $0x118] sm:$0xff]
        %v221 = vld [vmem:[%s159 + $0x120] sm:$0xff]
        %v222 = vld [vmem:[%s159 + $0x128] sm:$0xff]
        %v223 = vld [vmem:[%s159 + $0x130] sm:$0xff]
        %v224 = vld [vmem:[%s159 + $0x138] sm:$0xff]
        %v225 = vld [vmem:[%s159 + $0x140] sm:$0xff]
        %v226 = vld [vmem:[%s159 + $0x148] sm:$0xff]
        %v227 = vld [vmem:[%s159 + $0x150] sm:$0xff]
        %v228 = vld [vmem:[%s159 + $0x158] sm:$0xff]
        %v229 = vld [vmem:[%s159 + $0x160] sm:$0xff]
        %v230 = vld [vmem:[%s159 + $0x168] sm:$0xff]
        %v231 = vld [vmem:[%s159 + $0x170] sm:$0xff]
        %v232 = vld [vmem:[%s159 + $0x178] sm:$0xff]
        %v233 = vld [vmem:[%s159 + $0x180] sm:$0xff]
        %v234 = vld [vmem:[%s159 + $0x188] sm:$0xff]
        %v235 = vld [vmem:[%s159 + $0x190] sm:$0xff]
        %v236 = vld [vmem:[%s159 + $0x198] sm:$0xff]
        %v237 = vld [vmem:[%s159 + $0x1a0] sm:$0xff]
        %v238 = vld [vmem:[%s159 + $0x1a8] sm:$0xff]
        %v239 = vld [vmem:[%s159 + $0x1b0] sm:$0xff]
        %v240 = vld [vmem:[%s159 + $0x1b8] sm:$0xff]
        %v241 = vld [vmem:[%s159 + $0x1c0] sm:$0xff]
        %v242 = vld [vmem:[%s159 + $0x1c8] sm:$0xff]
        %v243 = vld [vmem:[%s159 + $0x1d0] sm:$0xff]
        %v244 = vld [vmem:[%s159 + $0x1d8] sm:$0xff]
        %v245 = vld [vmem:[%s159 + $0x1e0] sm:$0xff]
        %v246 = vld [vmem:[%s159 + $0x1e8] sm:$0xff]
        %v247 = vld [vmem:[%s159 + $0x1f0] sm:$0xff]
        %v248 = vld [vmem:[%s159 + $0x1f8] sm:$0xff]
        %v249 = vld [vmem:[%s159 + $0x200] sm:$0xff]
        %v250 = vld [vmem:[%s159 + $0x208] sm:$0xff]
        %v251 = vld [vmem:[%s159 + $0x210] sm:$0xff]
        %v252 = vld [vmem:[%s159 + $0x218] sm:$0xff]
        %v253 = vld [vmem:[%s159 + $0x220] sm:$0xff]
        %v254 = vld [vmem:[%s159 + $0x228] sm:$0xff]
        %v255 = vld [vmem:[%s159 + $0x230] sm:$0xff]
        %v256 = vld [vmem:[%s159 + $0x238] sm:$0xff]
        %v257 = vld [vmem:[%s159 + $0x240] sm:$0xff]
        %v258 = vld [vmem:[%s159 + $0x248] sm:$0xff]
        %v259 = vld [vmem:[%s159 + $0x250] sm:$0xff]
        %v260 = vld [vmem:[%s159 + $0x258] sm:$0xff]
        %v261 = vld [vmem:[%s159 + $0x260] sm:$0xff]
        %v262 = vld [vmem:[%s159 + $0x268] sm:$0xff]
        %v263 = vld [vmem:[%s159 + $0x270] sm:$0xff]
        %v264 = vld [vmem:[%s159 + $0x278] sm:$0xff]
        %v265 = vld [vmem:[%s159 + $0x280] sm:$0xff]
        %v266 = vld [vmem:[%s159 + $0x288] sm:$0xff]
        %v267 = vld [vmem:[%s159 + $0x290] sm:$0xff]
        %v268 = vld [vmem:[%s159 + $0x298] sm:$0xff]
        %v269 = vld [vmem:[%s159 + $0x2a0] sm:$0xff]
        %v270 = vld [vmem:[%s159 + $0x2a8] sm:$0xff]
        %v271 = vld [vmem:[%s159 + $0x2b0] sm:$0xff]
        %v272 = vld [vmem:[%s159 + $0x2b8] sm:$0xff]
        %v273 = vld [vmem:[%s159 + $0x2c0] sm:$0xff]
        %v274 = vld [vmem:[%s159 + $0x2c8] sm:$0xff]
        %v275 = vld [vmem:[%s159 + $0x2d0] sm:$0xff]
        %v276 = vld [vmem:[%s159 + $0x2d8] sm:$0xff]
        %v277 = vld [vmem:[%s159 + $0x2e0] sm:$0xff]
        %v278 = vld [vmem:[%s159 + $0x2e8] sm:$0xff]
        %v279 = vld [vmem:[%s159 + $0x2f0] sm:$0xff]
        %v280 = vld [vmem:[%s159 + $0x2f8] sm:$0xff]
        %v281 = vld [vmem:[%s159 + $0x300] sm:$0xff]
        %v282 = vld [vmem:[%s159 + $0x308] sm:$0xff]
        %v283 = vld [vmem:[%s159 + $0x310] sm:$0xff]
        %v284 = vld [vmem:[%s159 + $0x318] sm:$0xff]
        %v285 = vld [vmem:[%s159 + $0x320] sm:$0xff]
        %v286 = vld [vmem:[%s159 + $0x328] sm:$0xff]
        %v287 = vld [vmem:[%s159 + $0x330] sm:$0xff]
        %v288 = vld [vmem:[%s159 + $0x338] sm:$0xff]
        %v289 = vld [vmem:[%s159 + $0x340] sm:$0xff]
        %v290 = vld [vmem:[%s159 + $0x348] sm:$0xff]
        %v291 = vld [vmem:[%s159 + $0x350] sm:$0xff]
        %v292 = vld [vmem:[%s159 + $0x358] sm:$0xff]
        %v293 = vld [vmem:[%s159 + $0x360] sm:$0xff]
        %v294 = vld [vmem:[%s159 + $0x368] sm:$0xff]
        %v295 = vld [vmem:[%s159 + $0x370] sm:$0xff]
        %v296 = vld [vmem:[%s159 + $0x378] sm:$0xff]
        %v297 = vld [vmem:[%s159 + $0x380] sm:$0xff]
        %v298 = vld [vmem:[%s159 + $0x388] sm:$0xff]
        %v299 = vld [vmem:[%s159 + $0x390] sm:$0xff]
        %v300 = vld [vmem:[%s159 + $0x398] sm:$0xff]
        %v301 = vld [vmem:[%s159 + $0x3a0] sm:$0xff]
        %v302 = vld [vmem:[%s159 + $0x3a8] sm:$0xff]
        %v303 = vld [vmem:[%s159 + $0x3b0] sm:$0xff]
        %v304 = vld [vmem:[%s159 + $0x3b8] sm:$0xff]
        %v305 = vld [vmem:[%s159 + $0x3c0] sm:$0xff]
        %v306 = vld [vmem:[%s159 + $0x3c8] sm:$0xff]
        %v307 = vld [vmem:[%s159 + $0x3d0] sm:$0xff]
        %v308 = vld [vmem:[%s159 + $0x3d8] sm:$0xff]
        %v309 = vld [vmem:[%s159 + $0x3e0] sm:$0xff]
        %v310 = vld [vmem:[%s159 + $0x3e8] sm:$0xff]
        %v311 = vld [vmem:[%s159 + $0x3f0] sm:$0xff]
        %v312 = vld [vmem:[%s159 + $0x3f8] sm:$0xff]
        %v313 = vadd.f32 %v185, %v186
        %v314 = vadd.f32 %v313, %v187
        %v315 = vadd.f32 %v314, %v188
        %v316 = vadd.f32 %v315, %v189
        %v317 = vadd.f32 %v316, %v190
        %v318 = vadd.f32 %v317, %v191
        %v319 = vadd.f32 %v318, %v192
        %v320 = vadd.f32 %v319, %v193
        %v321 = vadd.f32 %v320, %v194
        %v322 = vadd.f32 %v321, %v195
        %v323 = vadd.f32 %v322, %v196
        %v324 = vadd.f32 %v323, %v197
        %v325 = vadd.f32 %v324, %v198
        %v326 = vadd.f32 %v325, %v199
        %v327 = vadd.f32 %v326, %v200
        %328 = vadd.xlane.f32.xlu0 %v327
        %v329 = vpop.xlane.xlu0 %328
        %v330 = vadd.f32 %v201, %v202
        %v331 = vadd.f32 %v330, %v203
        %v332 = vadd.f32 %v331, %v204
        %v333 = vadd.f32 %v332, %v205
        %v334 = vadd.f32 %v333, %v206
        %v335 = vadd.f32 %v334, %v207
        %v336 = vadd.f32 %v335, %v208
        %v337 = vadd.f32 %v336, %v209
        %v338 = vadd.f32 %v337, %v210
        %v339 = vadd.f32 %v338, %v211
        %v340 = vadd.f32 %v339, %v212
        %v341 = vadd.f32 %v340, %v213
        %v342 = vadd.f32 %v341, %v214
        %v343 = vadd.f32 %v342, %v215
        %v344 = vadd.f32 %v343, %v216
        %345 = vadd.xlane.f32.xlu0 %v344
        %v346 = vpop.xlane.xlu0 %345
        %v347 = vadd.f32 %v217, %v218
        %v348 = vadd.f32 %v347, %v219
        %v349 = vadd.f32 %v348, %v220
        %v350 = vadd.f32 %v349, %v221
        %v351 = vadd.f32 %v350, %v222
        %v352 = vadd.f32 %v351, %v223
        %v353 = vadd.f32 %v352, %v224
        %v354 = vadd.f32 %v353, %v225
        %v355 = vadd.f32 %v354, %v226
        %v356 = vadd.f32 %v355, %v227
        %v357 = vadd.f32 %v356, %v228
        %v358 = vadd.f32 %v357, %v229
        %v359 = vadd.f32 %v358, %v230
        %v360 = vadd.f32 %v359, %v231
        %v361 = vadd.f32 %v360, %v232
        %362 = vadd.xlane.f32.xlu0 %v361
        %v363 = vpop.xlane.xlu0 %362
        %v364 = vadd.f32 %v233, %v234
        %v365 = vadd.f32 %v364, %v235
        %v366 = vadd.f32 %v365, %v236
        %v367 = vadd.f32 %v366, %v237
        %v368 = vadd.f32 %v367, %v238
        %v369 = vadd.f32 %v368, %v239
        %v370 = vadd.f32 %v369, %v240
        %v371 = vadd.f32 %v370, %v241
        %v372 = vadd.f32 %v371, %v242
        %v373 = vadd.f32 %v372, %v243
        %v374 = vadd.f32 %v373, %v244
        %v375 = vadd.f32 %v374, %v245
        %v376 = vadd.f32 %v375, %v246
        %v377 = vadd.f32 %v376, %v247
        %v378 = vadd.f32 %v377, %v248
        %379 = vadd.xlane.f32.xlu0 %v378
        %v380 = vpop.xlane.xlu0 %379
        %v381 = vadd.f32 %v249, %v250
        %v382 = vadd.f32 %v381, %v251
        %v383 = vadd.f32 %v382, %v252
        %v384 = vadd.f32 %v383, %v253
        %v385 = vadd.f32 %v384, %v254
        %v386 = vadd.f32 %v385, %v255
        %v387 = vadd.f32 %v386, %v256
        %v388 = vadd.f32 %v387, %v257
        %v389 = vadd.f32 %v388, %v258
        %v390 = vadd.f32 %v389, %v259
        %v391 = vadd.f32 %v390, %v260
        %v392 = vadd.f32 %v391, %v261
        %v393 = vadd.f32 %v392, %v262
        %v394 = vadd.f32 %v393, %v263
        %v395 = vadd.f32 %v394, %v264
        %396 = vadd.xlane.f32.xlu0 %v395
        %v397 = vpop.xlane.xlu0 %396
        %v398 = vadd.f32 %v265, %v266
        %v399 = vadd.f32 %v398, %v267
        %v400 = vadd.f32 %v399, %v268
        %v401 = vadd.f32 %v400, %v269
        %v402 = vadd.f32 %v401, %v270
        %v403 = vadd.f32 %v402, %v271
        %v404 = vadd.f32 %v403, %v272
        %v405 = vadd.f32 %v404, %v273
        %v406 = vadd.f32 %v405, %v274
        %v407 = vadd.f32 %v406, %v275
        %v408 = vadd.f32 %v407, %v276
        %v409 = vadd.f32 %v408, %v277
        %v410 = vadd.f32 %v409, %v278
        %v411 = vadd.f32 %v410, %v279
        %v412 = vadd.f32 %v411, %v280
        %413 = vadd.xlane.f32.xlu0 %v412
        %v414 = vpop.xlane.xlu0 %413
        %v415 = vadd.f32 %v281, %v282
        %v416 = vadd.f32 %v415, %v283
        %v417 = vadd.f32 %v416, %v284
        %v418 = vadd.f32 %v417, %v285
        %v419 = vadd.f32 %v418, %v286
        %v420 = vadd.f32 %v419, %v287
        %v421 = vadd.f32 %v420, %v288
        %v422 = vadd.f32 %v421, %v289
        %v423 = vadd.f32 %v422, %v290
        %v424 = vadd.f32 %v423, %v291
        %v425 = vadd.f32 %v424, %v292
        %v426 = vadd.f32 %v425, %v293
        %v427 = vadd.f32 %v426, %v294
        %v428 = vadd.f32 %v427, %v295
        %v429 = vadd.f32 %v428, %v296
        %430 = vadd.xlane.f32.xlu0 %v429
        %v431 = vpop.xlane.xlu0 %430
        %v432 = vadd.f32 %v297, %v298
        %v433 = vadd.f32 %v432, %v299
        %v434 = vadd.f32 %v433, %v300
        %v435 = vadd.f32 %v434, %v301
        %v436 = vadd.f32 %v435, %v302
        %v437 = vadd.f32 %v436, %v303
        %v438 = vadd.f32 %v437, %v304
        %v439 = vadd.f32 %v438, %v305
        %v440 = vadd.f32 %v439, %v306
        %v441 = vadd.f32 %v440, %v307
        %v442 = vadd.f32 %v441, %v308
        %v443 = vadd.f32 %v442, %v309
        %v444 = vadd.f32 %v443, %v310
        %v445 = vadd.f32 %v444, %v311
        %v446 = vadd.f32 %v445, %v312
        %447 = vadd.xlane.f32.xlu0 %v446
        %v448 = vpop.xlane.xlu0 %447
        %v457 = vlaneseq
        %v458 = vand.u32 %v457, 127
        %v459 = vlaneseq
        %v460 = vshrl.u32 %v459, 7
        %v461 = vsub.s32 %v458, %v460
        %v462 = vrot.slane %v329, %v461
        %v463 = vadd.s32 %v458, 4294967288
        %v464 = vlaneseq
        %v465 = vshrl.u32 %v464, 7
        %v466 = vsub.s32 %v463, %v465
        %v467 = vrot.slane %v346, %v466
        %vm468 = vcmask 130112
        %v469 = vsel %vm468, %v467, %v462
        %v470 = vadd.s32 %v458, 4294967280
        %v471 = vlaneseq
        %v472 = vshrl.u32 %v471, 7
        %v473 = vsub.s32 %v470, %v472
        %v474 = vrot.slane %v363, %v473
        %vm475 = vcmask 195712
        %v476 = vsel %vm475, %v474, %v469
        %v477 = vadd.s32 %v458, 4294967272
        %v478 = vlaneseq
        %v479 = vshrl.u32 %v478, 7
        %v480 = vsub.s32 %v477, %v479
        %v481 = vrot.slane %v380, %v480
        %vm482 = vcmask 261312
        %v483 = vsel %vm482, %v481, %v476
        %v484 = vlaneseq
        %v485 = vshrl.u32 %v484, 7
        %v486 = vsub.s32 %v458, %v485
        %v487 = vrot.slane %v397, %v486
        %v488 = vlaneseq
        %v489 = vshrl.u32 %v488, 7
        %v490 = vsub.s32 %v463, %v489
        %v491 = vrot.slane %v414, %v490
        %v492 = vsel %vm468, %v491, %v487
        %v493 = vlaneseq
        %v494 = vshrl.u32 %v493, 7
        %v495 = vsub.s32 %v470, %v494
        %v496 = vrot.slane %v431, %v495
        %v497 = vsel %vm475, %v496, %v492
        %v498 = vlaneseq
        %v499 = vshrl.u32 %v498, 7
        %v500 = vsub.s32 %v477, %v499
        %v501 = vrot.slane %v448, %v500
        %v502 = vsel %vm482, %v501, %v497
        %vm503 = vcmask 1041409
        %v504 = vsel %vm503, %v502, %v483
        %v506 = vadd.f32 %v184, %v504
        %vm507 = vcmask 254976
        %508 = vst.msk [vmem:[#allocation2] sm:$0x3] %vm507, %v506
        %p509 = scmp.eq.s32.totalorder %s18, 1
        // Predicated region
        $region41: #{tpu_custom_call.1} parent=31 // pred_check
          %p510 = pneg %p509
        $region42: #{tpu_custom_call.1} parent=31 // pred_check_branch
          %512 = sbr.rel (%p510) target = $region44
        $region43: #{tpu_custom_call.1} parent=31 // pred_region
          %v513 = vld [vmem:[#allocation2] sm:$0x3]
          %v514 = vmul.f32 %v513, 0.00024414063
          %v515 = vld [vmem:[%s1] sm:$0xff]
          %v516 = vld [vmem:[%s1 + $0x8] sm:$0xff]
          %v517 = vld [vmem:[%s1 + $0x10] sm:$0xff]
          %v518 = vld [vmem:[%s1 + $0x18] sm:$0xff]
          %vm519 = vcmask 261120
          %v521 = vsel %vm519, %v514, 0
          %523 = vmatprep.subr.mxu0 0.0
          %524 = vmatpush1.msra.mxu0 %v515
          %525 = vmatprep.subr.mxu0 0.0
          %526 = vmatpush1.msra.mxu0 %v516
          %527 = vmatprep.subr.mxu0 0.0
          %528 = vmatpush1.msra.mxu0 %v517
          %529 = vmatprep.subr.mxu0 0.0
          %530 = vmatpush1.msra.mxu0 %v518
          %531 = vmatprep.subr.mxu0 0.0
          %532 = vmatpush1.msra.mxu0 0.0
          %533 = vmatprep.subr.mxu0 0.0
          %534 = vmatpush1.msra.mxu0 0.0
          %535 = vmatprep.subr.mxu0 0.0
          %536 = vmatpush1.msra.mxu0 0.0
          %537 = vmatprep.subr.mxu0 0.0
          %538 = vmatpush1.msra.mxu0 0.0
          %539 = vmatprep.subr.mxu0 0.0
          %540 = vmatpush1.msra.mxu0 0.0
          %541 = vmatprep.subr.mxu0 0.0
          %542 = vmatpush1.msra.mxu0 0.0
          %543 = vmatprep.subr.mxu0 0.0
          %544 = vmatpush1.msra.mxu0 0.0
          %545 = vmatprep.subr.mxu0 0.0
          %546 = vmatpush1.msra.mxu0 0.0
          %547 = vmatprep.subr.mxu0 0.0
          %548 = vmatpush1.msra.mxu0 0.0
          %549 = vmatprep.subr.mxu0 0.0
          %550 = vmatpush1.msra.mxu0 0.0
          %551 = vmatprep.subr.mxu0 0.0
          %552 = vmatpush1.msra.mxu0 0.0
          %553 = vmatprep.subr.mxu0 0.0
          %554 = vmatpush1.msra.mxu0 0.0
          %555 = vmatprep.subr.mxu0 0.0
          %556 = vmatpush1.msra.mxu0 0.0
          %557 = vmatprep.subr.mxu0 0.0
          %558 = vmatpush1.msra.mxu0 0.0
          %559 = vmatprep.subr.mxu0 0.0
          %560 = vmatpush1.msra.mxu0 0.0
          %561 = vmatprep.subr.mxu0 0.0
          %562 = vmatpush1.msra.mxu0 0.0
          %563 = vmatprep.subr.mxu0 0.0
          %564 = vmatpush1.msra.mxu0 0.0
          %565 = vmatprep.subr.mxu0 0.0
          %566 = vmatpush1.msra.mxu0 0.0
          %567 = vmatprep.subr.mxu0 0.0
          %568 = vmatpush1.msra.mxu0 0.0
          %569 = vmatprep.subr.mxu0 0.0
          %570 = vmatpush1.msra.mxu0 0.0
          %571 = vmatprep.subr.mxu0 0.0
          %572 = vmatpush1.msra.mxu0 0.0
          %573 = vmatprep.subr.mxu0 0.0
          %574 = vmatpush1.msra.mxu0 0.0
          %575 = vmatprep.subr.mxu0 0.0
          %576 = vmatpush1.msra.mxu0 0.0
          %577 = vmatprep.subr.mxu0 0.0
          %578 = vmatpush1.msra.mxu0 0.0
          %579 = vmatprep.subr.mxu0 0.0
          %580 = vmatpush1.msra.mxu0 0.0
          %581 = vmatprep.subr.mxu0 0.0
          %582 = vmatpush1.msra.mxu0 0.0
          %583 = vmatprep.subr.mxu0 0.0
          %584 = vmatpush1.msra.mxu0 0.0
          %585 = vmatprep.subr.mxu0 0.0
          %586 = vmatpush1.msra.mxu0 0.0
          %587 = vmatprep.mubr.f32.mxu0 0.0
          %588 = vmatmul.mubr.f32.gmra.mrb[0].mxu0 %v521
          %v589 = vpop.f32.mrb[0].mxu0
          %v590 = vadd.f32 0.0, %v589
          %v591 = vpop.f32.mrb[0].mxu0
          %592 = vdwg.mxu0
          %v593 = vmax.f32 %v590, 0.0
          %v594 = vld [vmem:[%s2] sm:$0x3]
          %vm595 = vcmask 15360
          %v597 = vsel %vm595, %v593, 0
          %vm599 = vcmask 1041408
          %v601 = vsel %vm599, %v594, 0
          %603 = vmatprep.subr.mxu0 0.0
          %604 = vmatpush1.msra.mxu0 %v601
          %605 = vmatprep.subr.mxu0 0.0
          %606 = vmatpush1.msra.mxu0 0.0
          %607 = vmatprep.subr.mxu0 0.0
          %608 = vmatpush1.msra.mxu0 0.0
          %609 = vmatprep.subr.mxu0 0.0
          %610 = vmatpush1.msra.mxu0 0.0
          %611 = vmatprep.subr.mxu0 0.0
          %612 = vmatpush1.msra.mxu0 0.0
          %613 = vmatprep.subr.mxu0 0.0
          %614 = vmatpush1.msra.mxu0 0.0
          %615 = vmatprep.subr.mxu0 0.0
          %616 = vmatpush1.msra.mxu0 0.0
          %617 = vmatprep.subr.mxu0 0.0
          %618 = vmatpush1.msra.mxu0 0.0
          %619 = vmatprep.subr.mxu0 0.0
          %620 = vmatpush1.msra.mxu0 0.0
          %621 = vmatprep.subr.mxu0 0.0
          %622 = vmatpush1.msra.mxu0 0.0
          %623 = vmatprep.subr.mxu0 0.0
          %624 = vmatpush1.msra.mxu0 0.0
          %625 = vmatprep.subr.mxu0 0.0
          %626 = vmatpush1.msra.mxu0 0.0
          %627 = vmatprep.subr.mxu0 0.0
          %628 = vmatpush1.msra.mxu0 0.0
          %629 = vmatprep.subr.mxu0 0.0
          %630 = vmatpush1.msra.mxu0 0.0
          %631 = vmatprep.subr.mxu0 0.0
          %632 = vmatpush1.msra.mxu0 0.0
          %633 = vmatprep.subr.mxu0 0.0
          %634 = vmatpush1.msra.mxu0 0.0
          %635 = vmatprep.subr.mxu0 0.0
          %636 = vmatpush1.msra.mxu0 0.0
          %637 = vmatprep.subr.mxu0 0.0
          %638 = vmatpush1.msra.mxu0 0.0
          %639 = vmatprep.subr.mxu0 0.0
          %640 = vmatpush1.msra.mxu0 0.0
          %641 = vmatprep.subr.mxu0 0.0
          %642 = vmatpush1.msra.mxu0 0.0
          %643 = vmatprep.subr.mxu0 0.0
          %644 = vmatpush1.msra.mxu0 0.0
          %645 = vmatprep.subr.mxu0 0.0
          %646 = vmatpush1.msra.mxu0 0.0
          %647 = vmatprep.subr.mxu0 0.0
          %648 = vmatpush1.msra.mxu0 0.0
          %649 = vmatprep.subr.mxu0 0.0
          %650 = vmatpush1.msra.mxu0 0.0
          %651 = vmatprep.subr.mxu0 0.0
          %652 = vmatpush1.msra.mxu0 0.0
          %653 = vmatprep.subr.mxu0 0.0
          %654 = vmatpush1.msra.mxu0 0.0
          %655 = vmatprep.subr.mxu0 0.0
          %656 = vmatpush1.msra.mxu0 0.0
          %657 = vmatprep.subr.mxu0 0.0
          %658 = vmatpush1.msra.mxu0 0.0
          %659 = vmatprep.subr.mxu0 0.0
          %660 = vmatpush1.msra.mxu0 0.0
          %661 = vmatprep.subr.mxu0 0.0
          %662 = vmatpush1.msra.mxu0 0.0
          %663 = vmatprep.subr.mxu0 0.0
          %664 = vmatpush1.msra.mxu0 0.0
          %665 = vmatprep.subr.mxu0 0.0
          %666 = vmatpush1.msra.mxu0 0.0
          %667 = vmatprep.mubr.f32.mxu0 0.0
          %668 = vmatmul.mubr.f32.gmra.mrb[0].mxu0 %v597
          %v669 = vpop.f32.mrb[0].mxu0
          %v670 = vadd.f32 0.0, %v669
          %v671 = vpop.f32.mrb[0].mxu0
          %672 = vdwg.mxu0
          %v673 = vsub.f32 0.0, %v670
          %v674 = vmul.f32 %v673, 1.442695
          %v675 = vpow.pop %v674
          %v676 = vadd.f32 %v675, 1.0
          %v677 = vrcp.pop %v676
          %v678 = vmul.f32 1.0, %v677
          %679 = vst.msk [vmem:[#allocation6] sm:$0x3] %vm507, %v678
        $region44: #{tpu_custom_call.1} parent=31 // pred_fallthru
          _
        // Predicated region
        $region45: #{tpu_custom_call.1} parent=31 // pred_check
          %p680 = pneg %p99
        $region46: #{tpu_custom_call.1} parent=31 // pred_check_branch
          %682 = sbr.rel (%p680) target = $region48
        $region47: #{tpu_custom_call.1} parent=31 // pred_region
          %s684 = ssub.s32 32, 32
          %685 = vsyncadd [#allocation5], %s684
          %s687 = sshll.u32 [#allocation6], 4
          %s688 = int_to_ptr.vmem [resolvable:$true] %s687
          %690 = dma.vmem_to_hbm [thread:$0]  %s688, 32, %s3, [#allocation5]
        $region48: #{tpu_custom_call.1} parent=31 // pred_fallthru
          _
        // Predicated region
        $region49: #{tpu_custom_call.1} parent=31 // pred_check
          %p691 = pneg %p99
        $region50: #{tpu_custom_call.1} parent=31 // pred_check_branch
          %693 = sbr.rel (%p691) target = $region52
        $region51: #{tpu_custom_call.1} parent=31 // pred_region
          %694 = dma.done [#allocation5], 32
        $region52: #{tpu_custom_call.1} parent=31 // pred_fallthru
          _
      $region32: #{tpu_custom_call.1} parent=5 // pred_fallthru
        _
      %p695 = scmp.le.s32.totalorder 2, %s13
      // Predicated region
      $region53: #{tpu_custom_call.1} parent=5 // pred_check
        %p696 = pneg %p695
      $region54: #{tpu_custom_call.1} parent=5 // pred_check_branch
        %698 = sbr.rel (%p696) target = $region56
      $region55: #{tpu_custom_call.1} parent=5 // pred_region
        %s699 = ssub.s32 %s13, 2
      $region56: #{tpu_custom_call.1} parent=5 // pred_fallthru
        _
    $region6: #{tpu_custom_call.1} parent=1 // loop_footer
      %s17 = sadd.s32 1, %s13
    $region7: #{tpu_custom_call.1} parent=1 // loop_footer_branch
      %12 = sbr.rel target = $region3
    $region8: #{tpu_custom_call.1} parent=1 // loop_exit
      _
    %700 = vsyncpa [#allocation4], 1
    %s701 = scalar_lea.sflag [#allocation4], 1
    %702 = vsyncpa %s701, 1
    %703 = vsyncpa [#allocation5], 1
    %s704 = scalar_lea.sflag [#allocation5], 1
    %705 = vsyncpa %s704, 1

</llo_original>
